<compile_context>
chip_gen: v6e
topology: v6e:2x2x1
jax: 0.10.0
libtpu: 0.0.40
codegen_flags: <defaults>
</compile_context>

<pallas_src>
import jax
import jax.numpy as jnp
from jax.experimental import pallas as pl
from jax.experimental.pallas import tpu as pltpu


# ---------------------------------------------------------------------------
# Pallas kernel: per-scale attention-weighted spatial pooling.
# One grid step = one batch element.  All heavy (O(C*N)) work stays in-kernel;
# everything O(C) / O(D) is hoisted to the wrapper.
#   s  = (gW) @ x                 (MXU matvec, lane-dense [1, N] scores)
#   a  = softmax(s) / N           (f32 on VPU/EUP, exact reciprocal, 1/N folded)
#   xa = sum_n a_n * x_n          (VPU multiply + XLU lane reduce over [C, N])
# Output is a lane-dense [1, C] row -> unmasked stores + contiguous writeback.
# ---------------------------------------------------------------------------
def _attn_pool_kernel(gw_ref, x_ref, o_ref):
    # gw_ref: (1, C) bf16   x_ref: (C, N) bf16   o_ref: (1, C) f32
    x_bf = x_ref[...]                                                    # [C, N]

    # Attention scores: single MXU matvec, lane-dense [1, N] row.
    s = jnp.dot(gw_ref[...], x_bf, preferred_element_type=jnp.float32)  # [1, N]

    # Softmax over the spatial (lane) axis in f32; fold 1/N into the denominator.
    s = s - jnp.max(s, axis=-1, keepdims=True)
    p = jnp.exp(s)
    n = x_ref.shape[1]
    denom = jnp.sum(p, axis=-1, keepdims=True) * n                      # [1, 1]
    inv = pl.reciprocal(denom, approx=False)   # exact: single element, cost is nil
    a = p * inv                                                          # [1, N]

    # Attention-weighted pooling over the already-resident x tile: VPU multiply +
    # XLU lane reduce.  No [D, N] intermediate, no large relayout.
    xa = jnp.sum(x_bf.astype(jnp.float32) * a, axis=1, keepdims=True)   # [C, 1]

    # Emit lane-dense (small C-element relayout) so the store is unmasked and the
    # writeback DMA is one contiguous burst.
    o_ref[...] = jnp.transpose(xa)                                       # [1, C]


def attention_spatial_pool(x_cn_bf, gw_bf):
    """x_cn_bf: [B, C, N] bf16 (NCHW reshaped, channel-major, zero-copy),
    gw_bf: [B, 1, C] bf16 (g @ W per batch)  ->  xa: [B, C] f32 with
    xa[b] = sum_n softmax_n((gW)·x[b,:,n]) / N * x[b,:,n]."""
    B, C, N = x_cn_bf.shape
    out = pl.pallas_call(
        _attn_pool_kernel,
        out_shape=jax.ShapeDtypeStruct((B, 1, C), jnp.float32),
        grid=(B,),
        in_specs=[
            pl.BlockSpec((pl.Squeezed(), 1, C), lambda b: (b, 0, 0)),
            pl.BlockSpec((pl.Squeezed(), C, N), lambda b: (b, 0, 0)),
        ],
        out_specs=pl.BlockSpec((pl.Squeezed(), 1, C), lambda b: (b, 0, 0)),
        compiler_params=pltpu.CompilerParams(dimension_semantics=("parallel",)),
    )(gw_bf, x_cn_bf)
    return out.reshape(B, C)


# ---------------------------------------------------------------------------
# Wrapper: NCHW -> [B, C, H*W] (pure reshape, no HBM transpose) + Pallas hot path.
# The surrounding O(B*C*D) GEMMs are tiny after the refactor and run as plain XLA.
# ---------------------------------------------------------------------------
def attention_model_forward(feature_maps_nchw, g, params):
    g32 = g.astype(jnp.float32)
    pooled = []
    for x_nchw, (w, b) in zip(feature_maps_nchw, params["linear_map"]):
        B, C, H, W = x_nchw.shape
        N = H * W
        x_cn = x_nchw.reshape(B, C, N)            # channel-major view, zero-copy
        if x_cn.dtype != jnp.bfloat16:
            # In production, keep the backbone output in bf16 to avoid this pass.
            x_cn = x_cn.astype(jnp.bfloat16)
        # s_n = g·(W x_n + b) = (gW)·x_n + g·b; the constant g·b cancels in softmax,
        # so only gW is needed.  Tiny XLA GEMM (full lane-width RHS).
        gw = g32 @ w.astype(jnp.float32)          # [B, C]
        xa = attention_spatial_pool(x_cn, gw.astype(jnp.bfloat16).reshape(B, 1, C))
        # pooled = mean_n a_n (W x_n + b); the kernel already folded 1/N into a,
        # hence pooled = xa @ W^T + b/N.  Tiny XLA GEMM.
        pooled.append(xa @ w.astype(jnp.float32).T + b * (1.0 / N))
    feat = jnp.concatenate(pooled, axis=1)        # [B, len(L)*D]
    # fc_cls: [B, 3D] x [3D, num_classes] — far too small for a dedicated Pallas
    # kernel (review #8); plain XLA GEMM, no per-forward weight padding.
    w_cls, b_cls = params["fc_cls"]
    return feat @ w_cls.T + b_cls                 # [B, num_classes]


# Pure-JAX f32 reference for correctness checking (mirrors the PyTorch forward).
def attention_model_ref(feature_maps_nchw, g, params):
    pooled = []
    for x_nchw, (w, b) in zip(feature_maps_nchw, params["linear_map"]):
        B, C, H, W = x_nchw.shape
        x_bnc = jnp.transpose(x_nchw.astype(jnp.float32), (0, 2, 3, 1)).reshape(
            B, H * W, C)
        fea = x_bnc @ w.T + b                     # [B, N, D] (torch-layout weight)
        s = jnp.einsum("bnd,bd->bn", fea, g)      # [B, N]
        a = jax.nn.softmax(s, axis=1)
        pooled.append(jnp.mean(a[:, :, None] * fea, axis=1))
    feat = jnp.concatenate(pooled, axis=1)
    w_cls, b_cls = params["fc_cls"]
    return feat @ w_cls.T + b_cls


if __name__ == "__main__":
    # Small, deterministic stand-in shapes (scaled-down ResNet-101 feature pyramid).
    # Real sizes: C in {512, 1024, 2048}, N in {784, 196, 49}, D = 2048 — there the
    # Pallas kernel is x-bandwidth bound and C is a multiple of 128 (fully unmasked
    # lane-dense output stores).
    B = 2                      # even -> both v7x TensorCores busy under megacore
    D = 128                    # stand-in for 2048 (global / mapped feature dim)
    num_classes = 10
    # (C_l, H_l, W_l) for layer2, layer3, layer4 stand-ins
    scales = [(64, 8, 8), (128, 4, 4), (256, 2, 2)]

    key = jax.random.PRNGKey(0)
    keys = jax.random.split(key, 16)
    ki = iter(keys)

    # Synthetic backbone outputs (deterministic) — see TODO(synk) above.
    feature_maps = [
        jax.random.normal(next(ki), (B, c, h, w), dtype=jnp.float32)
        for (c, h, w) in scales
    ]
    g = jax.random.normal(next(ki), (B, D), dtype=jnp.float32)   # output of model.fc

    # Parameters in PyTorch nn.Linear layout: weight [out_features, in_features].
    params = {
        "linear_map": [
            (
                0.02 * jax.random.normal(next(ki), (D, c), dtype=jnp.float32),
                0.02 * jax.random.normal(next(ki), (D,), dtype=jnp.float32),
            )
            for (c, _, _) in scales
        ],
        "fc_cls": (
            0.02 * jax.random.normal(next(ki), (num_classes, len(scales) * D),
                                     dtype=jnp.float32),
            0.02 * jax.random.normal(next(ki), (num_classes,), dtype=jnp.float32),
        ),
    }

    logits = attention_model_forward(feature_maps, g, params)
    logits = jax.block_until_ready(logits)

    ref = attention_model_ref(feature_maps, g, params)
    assert logits.shape == (B, num_classes)
    # bf16 feature-map / score quantization with f32 accumulation -> slightly looser
    # tolerance than a pure-f32 comparison (dropping the constant g·b score term and
    # folding 1/N are exact transformations).
    assert jnp.allclose(logits, ref, atol=2e-2, rtol=2e-2), "mismatch vs reference"

    print("KERNEL_OK")
</pallas_src>

<mosaic_0001>
module attributes {stable_mosaic.version = 11 : i64} {
  func.func @_attn_pool_kernel(%arg0: i32, %arg1: memref<1x1x64xbf16, #tpu.memory_space<vmem>>, %arg2: memref<1x64x64xbf16, #tpu.memory_space<vmem>>, %arg3: memref<1x1x64xf32, #tpu.memory_space<vmem>>) attributes {dimension_semantics = [#tpu.dimension_semantics<parallel>], iteration_bounds = array<i64: 2>, scalar_prefetch = 0 : i64, scratch_operands = 0 : i64, tpu.core_type = #tpu.core_type<tc>, window_params = [{transform_indices = @transform_0, window_bounds = array<i64: 1, 1, 64>}, {transform_indices = @transform_1, window_bounds = array<i64: 1, 64, 64>}, {transform_indices = @transform_2, window_bounds = array<i64: 1, 1, 64>}]} {
    %c0 = arith.constant 0 : index
    %c0_0 = arith.constant 0 : index
    %c0_1 = arith.constant 0 : index
    %0 = vector.load %arg2[%c0, %c0_0, %c0_1] : memref<1x64x64xbf16, #tpu.memory_space<vmem>>, vector<1x64x64xbf16>
    %1 = vector.shape_cast %0 : vector<1x64x64xbf16> to vector<64x64xbf16>
    %c0_2 = arith.constant 0 : index
    %c0_3 = arith.constant 0 : index
    %c0_4 = arith.constant 0 : index
    %2 = vector.load %arg1[%c0_2, %c0_3, %c0_4] : memref<1x1x64xbf16, #tpu.memory_space<vmem>>, vector<1x1x64xbf16>
    %3 = vector.shape_cast %2 : vector<1x1x64xbf16> to vector<1x64xbf16>
    %cst = arith.constant dense<0.000000e+00> : vector<1x64xf32>
    %4 = tpu.matmul %3, %1, %cst {dimension_numbers = #tpu.dot_dimension_numbers<[1], [0], [0], [1], [0, 0, 1, 1], [], []>} : vector<1x64xbf16>, vector<64x64xbf16>, vector<1x64xf32> -> vector<1x64xf32>
    %cst_5 = arith.constant dense<0xFF800000> : vector<1xf32>
    %5 = vector.multi_reduction <maximumf>, %4, %cst_5 [1] : vector<1x64xf32> to vector<1xf32>
    %6 = vector.shape_cast %5 : vector<1xf32> to vector<1x1xf32>
    %7 = vector.broadcast %6 : vector<1x1xf32> to vector<1x64xf32>
    %8 = arith.subf %4, %7 : vector<1x64xf32>
    %9 = math.exp %8 : vector<1x64xf32>
    %cst_6 = arith.constant dense<0.000000e+00> : vector<1xf32>
    %10 = vector.multi_reduction <add>, %9, %cst_6 [1] : vector<1x64xf32> to vector<1xf32>
    %11 = vector.shape_cast %10 : vector<1xf32> to vector<1x1xf32>
    %cst_7 = arith.constant 6.400000e+01 : f32
    %12 = vector.broadcast %cst_7 : f32 to vector<1x1xf32>
    %13 = arith.mulf %11, %12 : vector<1x1xf32>
    %14 = tpu.reciprocal %13 : vector<1x1xf32> -> vector<1x1xf32>
    %15 = vector.broadcast %14 : vector<1x1xf32> to vector<1x64xf32>
    %16 = arith.mulf %9, %15 : vector<1x64xf32>
    %17 = arith.extf %1 : vector<64x64xbf16> to vector<64x64xf32>
    %18 = vector.broadcast %16 : vector<1x64xf32> to vector<64x64xf32>
    %19 = arith.mulf %17, %18 : vector<64x64xf32>
    %cst_8 = arith.constant dense<0.000000e+00> : vector<64xf32>
    %20 = vector.multi_reduction <add>, %19, %cst_8 [1] : vector<64x64xf32> to vector<64xf32>
    %21 = vector.shape_cast %20 : vector<64xf32> to vector<64x1xf32>
    %22 = tpu.transpose %21, [1, 0] : vector<64x1xf32> -> vector<1x64xf32>
    %c0_9 = arith.constant 0 : index
    %c0_10 = arith.constant 0 : index
    %c0_11 = arith.constant 0 : index
    %23 = vector.load %arg3[%c0_9, %c0_10, %c0_11] : memref<1x1x64xf32, #tpu.memory_space<vmem>>, vector<1x1x64xf32>
    %24 = vector.shape_cast %23 : vector<1x1x64xf32> to vector<1x64xf32>
    %25 = vector.shape_cast %22 : vector<1x64xf32> to vector<1x1x64xf32>
    tpu.vector_store %arg3[%c0_9, %c0_10, %c0_11], %25 {strides = array<i32>} : memref<1x1x64xf32, #tpu.memory_space<vmem>>, vector<1x1x64xf32>,
    return
  }
  func.func @transform_0(%arg0: i32) -> (i32, i32, i32) {
    %c0_i32 = arith.constant 0 : i32
    %c0_i32_0 = arith.constant 0 : i32
    %c0_i32_1 = arith.constant 0 : i32
    return %arg0, %c0_i32, %c0_i32_0 : i32, i32, i32
  }
  func.func @transform_1(%arg0: i32) -> (i32, i32, i32) {
    %c0_i32 = arith.constant 0 : i32
    %c0_i32_0 = arith.constant 0 : i32
    %c0_i32_1 = arith.constant 0 : i32
    return %arg0, %c0_i32, %c0_i32_0 : i32, i32, i32
  }
  func.func @transform_2(%arg0: i32) -> (i32, i32, i32) {
    %c0_i32 = arith.constant 0 : i32
    %c0_i32_0 = arith.constant 0 : i32
    %c0_i32_1 = arith.constant 0 : i32
    return %arg0, %c0_i32, %c0_i32_0 : i32, i32, i32
  }
}

</mosaic_0001>

<llo_original>
// kernel: tpu_custom_call.1
$region0: #{tpu_custom_call.1}
  #allocation0 [shape = 'u32[]', space=smem, size = 0x4, offset = 0x4, fixed_abs, tag = 'smem constant byte address 0x4 - core index']
  #allocation1 [shape = 'u32[144,128]{1,0:T(1,128)}', space=vmem, size = 0x12000, scoped, tag = 'internal scratch']
  %s0 = inlined_call_operand.vmem [shape: bf16[2,1,64], index: 0, kind: input, shape index: {}]
  %s1 = inlined_call_operand.hbm [shape: bf16[2,64,64], index: 1, kind: input, shape index: {}]
  %s2 = inlined_call_operand.hbm [shape: f32[2,1,64], index: 2, kind: output, shape index: {}]
  %s3 = sld [smem:[#allocation0]]
  $region45: #{tpu_custom_call.1} parent=0
    _
  %s5 = ssub.s32 1, %s3
  %s6 = scalar_select 0, %s5, %s3
  $region1: #{tpu_custom_call.1} parent=0
    #allocation2 [shape = 'u8[32768]{0}', space=vmem, size = 0x8000, scoped, tag = 'input window, operand 1']
    #allocation3 [shape = 's32[2]{0}', space=sflag, size = 0x8, scoped, tag = 'scoped memory for tpu_custom_call.1']
    #allocation4 [shape = 's32[2]{0}', space=sflag, size = 0x8, scoped, tag = 'scoped memory for tpu_custom_call.1']
    #allocation5 [shape = 'u8[1024]{0}', space=vmem, size = 0x400, scoped, tag = 'output window, operand 0']
    %7 = vsyncpa [#allocation3], 0
    %s8 = scalar_lea.sflag [#allocation3], 1
    %9 = vsyncpa %s8, 0
    %10 = vsyncpa [#allocation4], 0
    %s11 = scalar_lea.sflag [#allocation4], 1
    %12 = vsyncpa %s11, 0
    loop: start=0, step=1, limit=4
    $region2: #{tpu_custom_call.1} parent=1 // loop_pre_header
      _
    $region3: #{tpu_custom_call.1} parent=1 // loop_header
      %s14 = sphi 0, %s18
      %p15 = scmp.ge.s32.totalorder %s14, 4
      %s24 = sphi 0, %s26
      %s27 = sphi 0, %s24
      %s28 = sphi 0, %s27
      %s44 = sphi 0, %s28
      %s50 = sphi 0, %s52
      %s53 = sphi 0, %s50
      %s54 = sphi 0, %s53
      %s70 = sphi 0, %s54
      %s76 = sphi 0, %s78
      %s79 = sphi 0, %s76
      %s80 = sphi 0, %s79
      %s96 = sphi 0, %s80
    $region4: #{tpu_custom_call.1} parent=1 // loop_header_branch
      %17 = sbr.rel (%p15) target = $region8
    $region5: #{tpu_custom_call.1} parent=1 // loop_body
      %s19 = ssub.s32 %s14, 1
      %s20 = ssub.s32 %s14, 2
      %s21 = sadd.s32 %s14, 1
      %s22 = ssub.s32 %s14, %s21
      %p23 = scmp.eq.s32.totalorder %s22, 0
      %s25 = sadd.s32 %s24, 1
      %s26 = scalar_select %p23, %s24, %s25
      %p29 = pneg %p23
      %p30 = scmp.eq.s32.totalorder %s14, 1
      %p31 = por %p29, %p30
      %p32 = scmp.ne.s32.totalorder %s24, %s27
      %p33 = scmp.eq.s32.totalorder %s14, 0
      %p34 = por %p32, %p33
      %p35 = scmp.ne.s32.totalorder %s24, %s27
      %p36 = scmp.eq.s32.totalorder %s19, 1
      %p37 = por %p35, %p36
      %p38 = scmp.ne.s32.totalorder %s27, %s28
      %p39 = scmp.eq.s32.totalorder %s19, 0
      %p40 = por %p38, %p39
      %p41 = scmp.ne.s32.totalorder %s27, %s28
      %p42 = scmp.eq.s32.totalorder %s20, 1
      %p43 = por %p41, %p42
      %p45 = scmp.ne.s32.totalorder %s28, %s44
      %p46 = scmp.eq.s32.totalorder %s20, 0
      %p47 = por %p45, %p46
      %s48 = ssub.s32 %s14, %s21
      %p49 = scmp.eq.s32.totalorder %s48, 0
      %s51 = sadd.s32 %s50, 1
      %s52 = scalar_select %p49, %s50, %s51
      %p55 = pneg %p49
      %p56 = scmp.eq.s32.totalorder %s14, 1
      %p57 = por %p55, %p56
      %p58 = scmp.ne.s32.totalorder %s50, %s53
      %p59 = scmp.eq.s32.totalorder %s14, 0
      %p60 = por %p58, %p59
      %p61 = scmp.ne.s32.totalorder %s50, %s53
      %p62 = scmp.eq.s32.totalorder %s19, 1
      %p63 = por %p61, %p62
      %p64 = scmp.ne.s32.totalorder %s53, %s54
      %p65 = scmp.eq.s32.totalorder %s19, 0
      %p66 = por %p64, %p65
      %p67 = scmp.ne.s32.totalorder %s53, %s54
      %p68 = scmp.eq.s32.totalorder %s20, 1
      %p69 = por %p67, %p68
      %p71 = scmp.ne.s32.totalorder %s54, %s70
      %p72 = scmp.eq.s32.totalorder %s20, 0
      %p73 = por %p71, %p72
      %s74 = ssub.s32 %s14, %s21
      %p75 = scmp.eq.s32.totalorder %s74, 0
      %s77 = sadd.s32 %s76, 1
      %s78 = scalar_select %p75, %s76, %s77
      %p81 = pneg %p75
      %p82 = scmp.eq.s32.totalorder %s14, 1
      %p83 = por %p81, %p82
      %p84 = scmp.ne.s32.totalorder %s76, %s79
      %p85 = scmp.eq.s32.totalorder %s14, 0
      %p86 = por %p84, %p85
      %p87 = scmp.ne.s32.totalorder %s76, %s79
      %p88 = scmp.eq.s32.totalorder %s19, 1
      %p89 = por %p87, %p88
      %p90 = scmp.ne.s32.totalorder %s79, %s80
      %p91 = scmp.eq.s32.totalorder %s19, 0
      %p92 = por %p90, %p91
      %p93 = scmp.ne.s32.totalorder %s79, %s80
      %p94 = scmp.eq.s32.totalorder %s20, 1
      %p95 = por %p93, %p94
      %p97 = scmp.ne.s32.totalorder %s80, %s96
      %p98 = scmp.eq.s32.totalorder %s20, 0
      %p99 = por %p97, %p98
      %p100 = scmp.le.s32.totalorder 1, %s14
      %p101 = scmp.lt.s32.totalorder %s14, 3
      %p102 = pnand %p100, %p101
      %p103 = pneg %p102
      // Predicated region
      $region9: #{tpu_custom_call.1} parent=5 // pred_check
        _
      $region10: #{tpu_custom_call.1} parent=5 // pred_check_branch
        %105 = sbr.rel (%p102) target = $region12
      $region11: #{tpu_custom_call.1} parent=5 // pred_region
        %s106 = ssub.s32 %s14, 1
      $region12: #{tpu_custom_call.1} parent=5 // pred_fallthru
        _
      %p107 = scmp.lt.s32.totalorder %s14, 2
      // Predicated region
      $region13: #{tpu_custom_call.1} parent=5 // pred_check
        %p108 = pneg %p107
      $region14: #{tpu_custom_call.1} parent=5 // pred_check_branch
        %110 = sbr.rel (%p108) target = $region16
      $region15: #{tpu_custom_call.1} parent=5 // pred_region
        // Predicated region
        $region17: #{tpu_custom_call.1} parent=15 // pred_check
          %p111 = pneg %p34
        $region18: #{tpu_custom_call.1} parent=15 // pred_check_branch
          %113 = sbr.rel (%p111) target = $region20
        $region19: #{tpu_custom_call.1} parent=15 // pred_region
          %p114 = scmp.lt.s32.totalorder %s14, 1
          %s115 = scalar_select %p114, %s14, 1
          %s116 = scalar_lea.vmem %s0, %s115
        $region20: #{tpu_custom_call.1} parent=15 // pred_fallthru
          _
        // Predicated region
        $region21: #{tpu_custom_call.1} parent=15 // pred_check
          %p117 = pneg %p60
        $region22: #{tpu_custom_call.1} parent=15 // pred_check_branch
          %119 = sbr.rel (%p117) target = $region24
        $region23: #{tpu_custom_call.1} parent=15 // pred_region
          %s120 = sand.u32 %s50, 1
          %s121 = scalar_lea.sflag [#allocation3], %s120
          %s122 = sand.u32 %s50, 1
          %s123 = smul.addr %s122, 32
          %s124 = scalar_lea.vmem [#allocation2], %s123
          %s126 = ssub.s32 512, 512
          %127 = vsyncadd %s121, %s126
          %s128 = smul.addr %s14, 8
          %s129 = smul.addr %s128, 64
          %s130 = scalar_lea.hbm %s1, %s129
          %s131 = sshll.u32 %s124, 4
          %s132 = int_to_ptr.vmem [resolvable:$true] %s131
          %137 = dma.hbm_to_vmem [thread:$0]  %s130, 512, %s132, %s121, 64, 64, 4
        $region24: #{tpu_custom_call.1} parent=15 // pred_fallthru
          _
      $region16: #{tpu_custom_call.1} parent=5 // pred_fallthru
        _
      %p138 = scmp.le.s32.totalorder 1, %s14
      %p139 = scmp.lt.s32.totalorder %s14, 3
      %p140 = pnand %p138, %p139
      %p141 = pneg %p140
      // Predicated region
      $region25: #{tpu_custom_call.1} parent=5 // pred_check
        _
      $region26: #{tpu_custom_call.1} parent=5 // pred_check_branch
        %143 = sbr.rel (%p140) target = $region28
      $region27: #{tpu_custom_call.1} parent=5 // pred_region
        %s144 = ssub.s32 %s14, 1
        %s145 = sand.u32 %s53, 1
        %s146 = scalar_lea.sflag [#allocation3], %s145
        %s147 = sand.u32 %s53, 1
        %s148 = smul.addr %s147, 32
        %s149 = scalar_lea.vmem [#allocation2], %s148
        // Predicated region
        $region29: #{tpu_custom_call.1} parent=27 // pred_check
          %p150 = pneg %p66
        $region30: #{tpu_custom_call.1} parent=27 // pred_check_branch
          %152 = sbr.rel (%p150) target = $region32
        $region31: #{tpu_custom_call.1} parent=27 // pred_region
          %153 = dma.done %s146, 512
        $region32: #{tpu_custom_call.1} parent=27 // pred_fallthru
          _
        %p154 = scmp.lt.s32.totalorder %s19, 1
        %s155 = scalar_select %p154, %s19, 1
        %s156 = scalar_lea.vmem %s0, %s155
        %p157 = pneg %p40
        %p158 = pneg %p37
        %s159 = sand.u32 %s53, 1
        %s160 = scalar_lea.sflag [#allocation3], %s159
        %s161 = sand.u32 %s53, 1
        %s162 = smul.addr %s161, 32
        %s163 = scalar_lea.vmem [#allocation2], %s162
        %p164 = pneg %p66
        %p165 = pneg %p63
        %p166 = pneg %p92
        %p167 = pneg %p89
        %s168 = sand.u32 %s79, 1
        %s169 = scalar_lea.sflag [#allocation4], %s168
        %s170 = sand.u32 %s79, 1
        %s171 = scalar_lea.vmem [#allocation5], %s170
        %p172 = scmp.lt.s32.totalorder %s19, 1
        %s173 = scalar_select %p172, %s19, 1
        %s174 = scalar_lea.vmem %s0, %s173
        %v176 = vld [vmem:[%s149] sm:$0xf]
        %v177 = vld [vmem:[%s149 + $0x4] sm:$0xf]
        %v178 = vld [vmem:[%s149 + $0x8] sm:$0xf]
        %v179 = vld [vmem:[%s149 + $0xc] sm:$0xf]
        %v180 = vld [vmem:[%s149 + $0x10] sm:$0xf]
        %v181 = vld [vmem:[%s149 + $0x14] sm:$0xf]
        %v182 = vld [vmem:[%s149 + $0x18] sm:$0xf]
        %v183 = vld [vmem:[%s149 + $0x1c] sm:$0xf]
        %v184 = vld [vmem:[%s174] sm:$0x1]
        %v193 = vunpack.c.l.b16 %v176
        %v194 = vunpack.c.l.b16 %v177
        %v195 = vunpack.c.l.b16 %v178
        %v196 = vunpack.c.l.b16 %v179
        %v197 = vunpack.c.l.b16 %v180
        %v198 = vunpack.c.l.b16 %v181
        %v199 = vunpack.c.l.b16 %v182
        %v200 = vunpack.c.l.b16 %v183
        %v201 = vpack.c.b16 %v194, %v193
        %v202 = vpack.c.b16 %v196, %v195
        %v203 = vpack.c.b16 %v198, %v197
        %v204 = vpack.c.b16 %v200, %v199
        %vm209 = vcmask 523264
        %v211 = vsel %vm209, %v184, 0
        %213 = vmatprep.subr.bf16.mxu0 0
        %214 = vmatpush1.bf16.msra.mxu0 0
        %215 = vmatprep.subr.bf16.mxu0 0
        %216 = vmatpush1.bf16.msra.mxu0 0
        %217 = vmatprep.subr.bf16.mxu0 0
        %218 = vmatpush1.bf16.msra.mxu0 0
        %219 = vmatprep.subr.bf16.mxu0 0
        %220 = vmatpush1.bf16.msra.mxu0 0
        %221 = vmatprep.subr.bf16.mxu0 0
        %222 = vmatpush1.bf16.msra.mxu0 %v204
        %223 = vmatprep.subr.bf16.mxu0 0
        %224 = vmatpush1.bf16.msra.mxu0 %v203
        %225 = vmatprep.subr.bf16.mxu0 0
        %226 = vmatpush1.bf16.msra.mxu0 %v202
        %227 = vmatprep.subr.bf16.mxu0 0
        %228 = vmatpush1.bf16.msra.mxu0 %v201
        %229 = vmatprep.subr.bf16.mxu0 0
        %230 = vmatpush2.bf16.msra.mxu0 0
        %231 = vmatprep.subr.bf16.mxu0 0
        %232 = vmatpush2.bf16.msra.mxu0 0
        %233 = vmatprep.subr.bf16.mxu0 0
        %234 = vmatpush2.bf16.msra.mxu0 0
        %235 = vmatprep.subr.bf16.mxu0 0
        %236 = vmatpush2.bf16.msra.mxu0 0
        %237 = vmatprep.subr.bf16.mxu0 0
        %238 = vmatpush2.bf16.msra.mxu0 0
        %239 = vmatprep.subr.bf16.mxu0 0
        %240 = vmatpush2.bf16.msra.mxu0 0
        %241 = vmatprep.subr.bf16.mxu0 0
        %242 = vmatpush2.bf16.msra.mxu0 0
        %243 = vmatprep.subr.bf16.mxu0 0
        %244 = vmatpush2.bf16.msra.mxu0 0
        %245 = vmatprep.mubr.bf16.mxu0 0
        %246 = vmatmul.mubr.bf16.gmra.mxu0 %v211
        %v247 = vpop.f32.mrf.mxu0
        %v248 = vadd.f32 0.0, %v247
        %v249 = vpop.f32.mrf.mxu0
        %v250 = vpop.f32.mrf.mxu0
        %v251 = vpop.f32.mrf.mxu0
        %252 = vdwg.mxu0
        %vm253 = vcmask 516096
        %v254 = vsel %vm253, %v248, -inf
        %255 = vmax.xlane.f32.xlu0 %v254
        %v256 = vpop.xlane.xlu0 %255
        %v257 = vsub.f32 %v248, %v256
        %v258 = vmul.f32 %v257, 1.442695
        %v259 = vpow.pop %v258
        %v260 = vsel %vm253, %v259, 0.0
        %261 = vadd.xlane.f32.xlu0 %v260
        %v262 = vpop.xlane.xlu0 %261
        %v263 = vmul.f32 %v262, 64.0
        %v264 = vrcp.pop %v263
        %v265 = vmul.f32 %v259, %v264
        %v266 = vunpack.c.l.bf16 %v176
        %v267 = vunpack.c.l.bf16 %v177
        %v268 = vunpack.c.l.bf16 %v178
        %v269 = vunpack.c.l.bf16 %v179
        %v270 = vunpack.c.l.bf16 %v180
        %v271 = vunpack.c.l.bf16 %v181
        %v272 = vunpack.c.l.bf16 %v182
        %v273 = vunpack.c.l.bf16 %v183
        %v274 = vlaneseq
        %v275 = vshrl.u32 %v274, 7
        %v276 = vsub.s32 0, %v275
        %v277 = vrot.slane %v265, %v276
        %v278 = vmul.f32 %v266, %v277
        %v279 = vmul.f32 %v267, %v277
        %v280 = vmul.f32 %v268, %v277
        %v281 = vmul.f32 %v269, %v277
        %v282 = vmul.f32 %v270, %v277
        %v283 = vmul.f32 %v271, %v277
        %v284 = vmul.f32 %v272, %v277
        %v285 = vmul.f32 %v273, %v277
        %v286 = vsel %vm209, %v278, 0.0
        %287 = vadd.xlane.f32.xlu0 %v286
        %v288 = vpop.xlane.xlu0 %287
        %v289 = vsel %vm209, %v279, 0.0
        %290 = vadd.xlane.f32.xlu0 %v289
        %v291 = vpop.xlane.xlu0 %290
        %v292 = vsel %vm209, %v280, 0.0
        %293 = vadd.xlane.f32.xlu0 %v292
        %v294 = vpop.xlane.xlu0 %293
        %v295 = vsel %vm209, %v281, 0.0
        %296 = vadd.xlane.f32.xlu0 %v295
        %v297 = vpop.xlane.xlu0 %296
        %v298 = vsel %vm209, %v282, 0.0
        %299 = vadd.xlane.f32.xlu0 %v298
        %v300 = vpop.xlane.xlu0 %299
        %v301 = vsel %vm209, %v283, 0.0
        %302 = vadd.xlane.f32.xlu0 %v301
        %v303 = vpop.xlane.xlu0 %302
        %v304 = vsel %vm209, %v284, 0.0
        %305 = vadd.xlane.f32.xlu0 %v304
        %v306 = vpop.xlane.xlu0 %305
        %v307 = vsel %vm209, %v285, 0.0
        %308 = vadd.xlane.f32.xlu0 %v307
        %v309 = vpop.xlane.xlu0 %308
        %310 = vxpose.xlu0.b32.start [1/16] %v288, 128
        %311 = vxpose.xlu0.b32.cont [2/16] %v291, 128
        %312 = vxpose.xlu0.b32.cont [3/16] %v294, 128
        %313 = vxpose.xlu0.b32.cont [4/16] %v297, 128
        %314 = vxpose.xlu0.b32.cont [5/16] %v300, 128
        %315 = vxpose.xlu0.b32.cont [6/16] %v303, 128
        %316 = vxpose.xlu0.b32.cont [7/16] %v306, 128
        %317 = vxpose.xlu0.b32.cont [8/16] %v309, 128
        %318 = vxpose.xlu0.b32.cont [9/16] 0.0, 128
        %319 = vxpose.xlu0.b32.cont [10/16] 0.0, 128
        %320 = vxpose.xlu0.b32.cont [11/16] 0.0, 128
        %321 = vxpose.xlu0.b32.cont [12/16] 0.0, 128
        %322 = vxpose.xlu0.b32.cont [13/16] 0.0, 128
        %323 = vxpose.xlu0.b32.cont [14/16] 0.0, 128
        %324 = vxpose.xlu0.b32.cont [15/16] 0.0, 128
        %325 = vxpose.xlu0.b32.end [16/16] 0.0, 128
        %v326 = vpop.trf.xlu0
        %v327 = vpop.trf.xlu0
        %v328 = vpop.trf.xlu0
        %v329 = vpop.trf.xlu0
        %v330 = vpop.trf.xlu0
        %v331 = vpop.trf.xlu0
        %v332 = vpop.trf.xlu0
        %v333 = vpop.trf.xlu0
        %v334 = vpop.trf.xlu0
        %v335 = vpop.trf.xlu0
        %v336 = vpop.trf.xlu0
        %v337 = vpop.trf.xlu0
        %v338 = vpop.trf.xlu0
        %v339 = vpop.trf.xlu0
        %v340 = vpop.trf.xlu0
        %v341 = vpop.trf.xlu0
        %342 = vst.msk [vmem:[%s171] sm:$0x1] %vm253, %v326
        %s343 = sand.u32 %s79, 1
        %s344 = scalar_lea.sflag [#allocation4], %s343
        %s345 = sand.u32 %s79, 1
        %s346 = scalar_lea.vmem [#allocation5], %s345
        // Predicated region
        $region33: #{tpu_custom_call.1} parent=27 // pred_check
          %p347 = pneg %p89
        $region34: #{tpu_custom_call.1} parent=27 // pred_check_branch
          %349 = sbr.rel (%p347) target = $region36
        $region35: #{tpu_custom_call.1} parent=27 // pred_region
          %s351 = ssub.s32 16, 16
          %352 = vsyncadd %s344, %s351
          %s353 = smul.addr %s19, 16
          %s354 = scalar_lea.hbm %s2, %s353
          %s356 = sshll.u32 %s346, 4
          %s357 = int_to_ptr.vmem [resolvable:$true] %s356
          %359 = dma.vmem_to_hbm [thread:$0]  %s357, 16, %s354, %s344
        $region36: #{tpu_custom_call.1} parent=27 // pred_fallthru
          _
      $region28: #{tpu_custom_call.1} parent=5 // pred_fallthru
        _
      %p360 = scmp.le.s32.totalorder 2, %s14
      // Predicated region
      $region37: #{tpu_custom_call.1} parent=5 // pred_check
        %p361 = pneg %p360
      $region38: #{tpu_custom_call.1} parent=5 // pred_check_branch
        %363 = sbr.rel (%p361) target = $region40
      $region39: #{tpu_custom_call.1} parent=5 // pred_region
        %s364 = ssub.s32 %s14, 2
        // Predicated region
        $region41: #{tpu_custom_call.1} parent=39 // pred_check
          %p365 = pneg %p95
        $region42: #{tpu_custom_call.1} parent=39 // pred_check_branch
          %367 = sbr.rel (%p365) target = $region44
        $region43: #{tpu_custom_call.1} parent=39 // pred_region
          %s368 = sand.u32 %s80, 1
          %s369 = scalar_lea.sflag [#allocation4], %s368
          %s370 = sand.u32 %s80, 1
          %s371 = scalar_lea.vmem [#allocation5], %s370
          %372 = dma.done %s369, 16
        $region44: #{tpu_custom_call.1} parent=39 // pred_fallthru
          _
      $region40: #{tpu_custom_call.1} parent=5 // pred_fallthru
        _
    $region6: #{tpu_custom_call.1} parent=1 // loop_footer
      %s18 = sadd.s32 1, %s14
    $region7: #{tpu_custom_call.1} parent=1 // loop_footer_branch
      %13 = sbr.rel target = $region3
    $region8: #{tpu_custom_call.1} parent=1 // loop_exit
      _
    %373 = vsyncpa [#allocation3], 1
    %s374 = scalar_lea.sflag [#allocation3], 1
    %375 = vsyncpa %s374, 1
    %376 = vsyncpa [#allocation4], 1
    %s377 = scalar_lea.sflag [#allocation4], 1
    %378 = vsyncpa %s377, 1

</llo_original>
